<compile_context>
chip_gen: v7x
topology: tpu7x:2x2x1
jax: 0.10.0
libtpu: 0.0.40
codegen_flags: <defaults>
</compile_context>

<pallas_src>
import jax
import jax.numpy as jnp
from jax.experimental import pallas as pl
from jax.experimental.pallas import tpu as pltpu


def adaptive_loss_kernel(in_ref, out_ref):
    """in_ref : (2,4) f32  row0 = [L_data, L_physics, L_params, L_init]
                           row1 = [0, 0, w_params, w_init]
       out_ref: (2,4) f32  row0 = all four weights, row1 = total loss broadcast."""
    eps = jnp.float32(1e-8)

    v = in_ref[...]                      # (2, 4) single tiny load
    x = v[0:1, :]                        # (1, 4) losses
    cw = v[1:2, :]                       # (1, 4) [0, 0, w_params, w_init]

    # Compile-time lane mask [1,1,0,0] (soft lanes) -- no DMA, folded by Mosaic.
    lane = jax.lax.broadcasted_iota(jnp.int32, (1, 4), 1)
    mask = (lane < 2).astype(jnp.float32)

    # softmax(log(x+eps)) over first two lanes == (x+eps) / ((L_data+eps)+(L_physics+eps)):
    # no log/exp (EUP-heavy) and no cross-lane max; pure VALU + one EUP reciprocal.
    xs = (x + eps) * mask                                    # soft lanes only, 0 elsewhere
    denom = jnp.sum(xs, axis=1, keepdims=True)               # (1, 1)
    w_all = xs * pl.reciprocal(denom, approx=False) + cw     # [w_data, w_phys, w_params, w_init]

    total = jnp.sum(w_all * x, axis=1, keepdims=True)        # (1, 1)

    # Single full-tile store (both rows live in the same (8,128) vreg tile).
    out_ref[...] = jnp.concatenate([w_all, jnp.broadcast_to(total, (1, 4))], axis=0)


@jax.jit
def adaptive_loss_weights(losses_dict, const_weights):
    """Jittable forward. Returns (total_loss scalar, weights (4,)) as device arrays.
    weights = [w_data, w_physics, w_params, w_init]."""
    x = jnp.stack([
        losses_dict['L_data'], losses_dict['L_physics'],
        losses_dict['L_params'], losses_dict['L_init'],
    ]).astype(jnp.float32)                                            # (4,)
    cw = jnp.concatenate([jnp.zeros((2,), jnp.float32),
                          const_weights.astype(jnp.float32)])          # (4,)
    packed = jnp.stack([x, cw], axis=0)                                # (2, 4) single kernel input

    out = pl.pallas_call(
        adaptive_loss_kernel,
        out_shape=jax.ShapeDtypeStruct((2, 4), jnp.float32),
        in_specs=[pl.BlockSpec(memory_space=pltpu.MemorySpace.VMEM)],
        out_specs=pl.BlockSpec(memory_space=pltpu.MemorySpace.VMEM),
        cost_estimate=pl.CostEstimate(flops=16, transcendentals=1, bytes_accessed=64),
    )(packed)

    total_loss = out[1, 0]
    weights = out[0]
    return total_loss, weights


def adaptive_loss_weights_with_output(losses_dict, const_weights):
    """PyTorch-module-style convenience: (total_loss, dict of python-float weights).
    Does exactly ONE device->host pull (mirrors the four .item() calls in the torch module)."""
    total_loss, weights = adaptive_loss_weights(losses_dict, const_weights)
    w_host = jax.device_get(weights)
    output = {
        'data': float(w_host[0]),
        'physics': float(w_host[1]),
        'params': float(w_host[2]),
        'init': float(w_host[3]),
    }
    return total_loss, output


def _reference(losses_dict, const_weights):
    """Pure-JAX reference using the original log/exp softmax formulation."""
    eps = 1e-8
    lg = jnp.log(jnp.stack([losses_dict['L_data'], losses_dict['L_physics']]) + eps)
    w = jax.nn.softmax(lg, axis=0)
    total = (w[0] * losses_dict['L_data'] + w[1] * losses_dict['L_physics']
             + const_weights[0] * losses_dict['L_params']
             + const_weights[1] * losses_dict['L_init'])
    return total, w


if __name__ == "__main__":
    key = jax.random.PRNGKey(0)
    k1, k2, k3, k4 = jax.random.split(key, 4)

    # deterministic positive scalar losses (as the module's forward expects)
    losses = {
        'L_data':    jnp.exp(jax.random.normal(k1, (), jnp.float32)),
        'L_physics': jnp.exp(jax.random.normal(k2, (), jnp.float32)),
        'L_params':  jnp.exp(jax.random.normal(k3, (), jnp.float32)),
        'L_init':    jnp.exp(jax.random.normal(k4, (), jnp.float32)),
    }
    # self.const_weights = tensor([init_weights['params'], init_weights['init']])
    const_weights = jnp.array([0.1, 0.05], dtype=jnp.float32)

    # device-array path (no host syncs)
    total_loss, weights = adaptive_loss_weights(losses, const_weights)
    total_loss, weights = jax.block_until_ready((total_loss, weights))

    # PyTorch-style dict path (one device_get)
    _, output = adaptive_loss_weights_with_output(losses, const_weights)

    # sanity check against the pure-JAX log/exp softmax reference
    ref_total, ref_w = _reference(losses, const_weights)
    assert jnp.allclose(total_loss, ref_total, rtol=1e-5, atol=1e-6), (total_loss, ref_total)
    assert jnp.allclose(weights[0], ref_w[0], rtol=1e-5, atol=1e-6)
    assert jnp.allclose(weights[1], ref_w[1], rtol=1e-5, atol=1e-6)
    assert abs(output['data'] - float(ref_w[0])) < 1e-5
    assert abs(output['physics'] - float(ref_w[1])) < 1e-5
    assert abs(output['params'] - 0.1) < 1e-7
    assert abs(output['init'] - 0.05) < 1e-7

    print("KERNEL_OK")
</pallas_src>

<mosaic_0001>
module attributes {stable_mosaic.version = 11 : i64} {
  func.func @adaptive_loss_kernel(%arg0: memref<2x4xf32, #tpu.memory_space<vmem>>, %arg1: memref<2x4xf32, #tpu.memory_space<vmem>>) attributes {dimension_semantics = [], scalar_prefetch = 0 : i64, scratch_operands = 0 : i64, tpu.core_type = #tpu.core_type<tc>} {
    %c0 = arith.constant 0 : index
    %c0_0 = arith.constant 0 : index
    %0 = vector.load %arg0[%c0, %c0_0] : memref<2x4xf32, #tpu.memory_space<vmem>>, vector<2x4xf32>
    %1 = vector.extract_strided_slice %0 {offsets = [0, 0], sizes = [1, 4], strides = [1, 1]} : vector<2x4xf32> to vector<1x4xf32>
    %2 = vector.extract_strided_slice %0 {offsets = [1, 0], sizes = [1, 4], strides = [1, 1]} : vector<2x4xf32> to vector<1x4xf32>
    %3 = tpu.iota {dimensions = array<i32: 1>} : vector<1x4xi32>
    %c2_i32 = arith.constant 2 : i32
    %4 = vector.broadcast %c2_i32 : i32 to vector<1x4xi32>
    %5 = arith.cmpi slt, %3, %4 : vector<1x4xi32>
    %6 = arith.extui %5 : vector<1x4xi1> to vector<1x4xi32>
    %7 = arith.sitofp %6 : vector<1x4xi32> to vector<1x4xf32>
    %cst = arith.constant 9.99999993E-9 : f32
    %8 = vector.broadcast %cst : f32 to vector<1x4xf32>
    %9 = arith.addf %1, %8 : vector<1x4xf32>
    %10 = arith.mulf %9, %7 : vector<1x4xf32>
    %cst_1 = arith.constant dense<0.000000e+00> : vector<1xf32>
    %11 = vector.multi_reduction <add>, %10, %cst_1 [1] : vector<1x4xf32> to vector<1xf32>
    %12 = vector.shape_cast %11 : vector<1xf32> to vector<1x1xf32>
    %13 = tpu.reciprocal %12 : vector<1x1xf32> -> vector<1x1xf32>
    %14 = vector.broadcast %13 : vector<1x1xf32> to vector<1x4xf32>
    %15 = arith.mulf %10, %14 : vector<1x4xf32>
    %16 = arith.addf %15, %2 : vector<1x4xf32>
    %17 = arith.mulf %16, %1 : vector<1x4xf32>
    %cst_2 = arith.constant dense<0.000000e+00> : vector<1xf32>
    %18 = vector.multi_reduction <add>, %17, %cst_2 [1] : vector<1x4xf32> to vector<1xf32>
    %19 = vector.shape_cast %18 : vector<1xf32> to vector<1x1xf32>
    %20 = vector.shape_cast %19 : vector<1x1xf32> to vector<1x1xf32>
    %21 = vector.broadcast %20 : vector<1x1xf32> to vector<1x4xf32>
    %22 = tpu.concatenate %16, %21 in 0 : vector<1x4xf32>, vector<1x4xf32> -> vector<2x4xf32>
    %c0_3 = arith.constant 0 : index
    %c0_4 = arith.constant 0 : index
    %23 = vector.load %arg1[%c0_3, %c0_4] : memref<2x4xf32, #tpu.memory_space<vmem>>, vector<2x4xf32>
    tpu.vector_store %arg1[%c0_3, %c0_4], %22 {strides = array<i32>} : memref<2x4xf32, #tpu.memory_space<vmem>>, vector<2x4xf32>,
    return
  }
}

</mosaic_0001>

<llo_original>
// kernel: adaptive_loss_weights.1
$region0: #{adaptive_loss_weights.1}
  #allocation0 [shape = 'u32[]', space=smem, size = 0x4, offset = 0x4, fixed_abs, tag = 'smem constant byte address 0x4 - core index']
  #allocation1 [shape = 'u32[144,128]{1,0:T(1,128)}', space=vmem, size = 0x12000, scoped, tag = 'internal scratch']
  %s0 = inlined_call_operand.vmem [shape: f32[2,4], index: 0, kind: input, shape index: {}]
  %s1 = inlined_call_operand.vmem [shape: f32[2,4], index: 1, kind: output, shape index: {}]
  %s2 = sld [smem:[#allocation0]]
  $region14: #{adaptive_loss_weights.1} parent=0
    _
  %s4 = ssub.s32 1, %s2
  %s5 = scalar_select 0, %s4, %s2
  // Predicated region
  $region2: #{adaptive_loss_weights.1} parent=0 // pred_check
    _
  $region3: #{adaptive_loss_weights.1} parent=0 // pred_check_branch
    %7 = sbr.rel (0) target = $region5
  $region4: #{adaptive_loss_weights.1} parent=0 // pred_region
    _
  $region5: #{adaptive_loss_weights.1} parent=0 // pred_fallthru
    _
  %v8 = vld [vmem:[%s0] sm:$0x3]
  %v9 = vlaneseq
  %v10 = vand.u32 %v9, 127
  %vm11 = vcmp.lt.s32.totalorder %v10, 2
  %v12 = vsel %vm11, 1, 0
  %v13 = vcvt.s32.f32 %v12
  %v14 = vadd.f32 %v8, 1e-08
  %v15 = vmul.f32 %v14, %v13
  %vm16 = vcmask 24576
  %v17 = vsel %vm16, %v15, 0.0
  %18 = vadd.xlane.f32.xlu0 %v17
  %v19 = vpop.xlane.xlu0 %18
  %v20 = vrcp.pop %v19
  %v21 = vmul.f32 %v15, %v20
  %v23 = vrot.slane %v8, 1
  %v25 = vadd.f32 %v21, %v23
  %v26 = vmul.f32 %v25, %v8
  %v27 = vsel %vm16, %v26, 0.0
  %28 = vadd.xlane.f32.xlu0 %v27
  %v29 = vpop.xlane.xlu0 %28
  %v31 = vrot.slane %v29, 7
  %vm33 = vcmask 1040384
  %v34 = vsel %vm33, %v25, %v31
  %vm35 = vcmask 25600
  %36 = vst.msk [vmem:[%s1] sm:$0x3] %vm35, %v34
  // Predicated region
  $region6: #{adaptive_loss_weights.1} parent=0 // pred_check
    _
  $region7: #{adaptive_loss_weights.1} parent=0 // pred_check_branch
    %38 = sbr.rel (0) target = $region9
  $region8: #{adaptive_loss_weights.1} parent=0 // pred_region
    _
  $region9: #{adaptive_loss_weights.1} parent=0 // pred_fallthru
    _
  // Predicated region
  $region10: #{adaptive_loss_weights.1} parent=0 // pred_check
    _
  $region11: #{adaptive_loss_weights.1} parent=0 // pred_check_branch
    %40 = sbr.rel (0) target = $region13
  $region12: #{adaptive_loss_weights.1} parent=0 // pred_region
    _
  $region13: #{adaptive_loss_weights.1} parent=0 // pred_fallthru
    _

</llo_original>
